<compile_context>
chip_gen: v5e
topology: v5e:2x2
jax: 0.10.0
libtpu: 0.0.40
codegen_flags: <defaults>
</compile_context>

<pallas_src>
from functools import partial

import jax
import jax.numpy as jnp
from jax import lax
from jax.experimental import pallas as pl
from jax.experimental.pallas import tpu as pltpu

BN_EPS = 1e-5  # nn.BatchNorm1d default


def _round_up(v, m):
    return ((v + m - 1) // m) * m


def _pick_d_tile(dp):
    for t in (1024, 512, 256, 128):
        if dp % t == 0:
            return t
    return dp  # unreachable after padding


def _vmem_limit(estimate_bytes):
    # Generous headroom over the live estimate, but always below v7x's 64 MiB/TC.
    return int(min(56 * 1024 * 1024, max(24 * 1024 * 1024, estimate_bytes * 3 // 2)))


# ---------------------------------------------------------------------------
# Kernel 1: per-feature BN scale/shift over the full batch.
# grid = (Dp // td1, Np // tn1); N axis is the (last, "arbitrary") reduction axis.
# x streams as bf16; sums are accumulated in f32.
# ---------------------------------------------------------------------------
def _bn_stats_kernel(x_ref, gamma_ref, beta_ref, scale_ref, shift_ref,
                     s_ref, sq_ref, *, inv_n):
    b = pl.program_id(1)

    @pl.when(b == 0)
    def _init():
        s_ref[...] = jnp.zeros_like(s_ref)
        sq_ref[...] = jnp.zeros_like(sq_ref)

    x = x_ref[...].astype(jnp.float32)  # f32 accumulation of the bf16 stream
    # Two independent reductions (sum, sum of squares) so they can overlap on the XLU.
    s_ref[...] += jnp.sum(x, axis=0, keepdims=True)
    sq_ref[...] += jnp.sum(x * x, axis=0, keepdims=True)

    @pl.when(b == pl.num_programs(1) - 1)
    def _finalize():
        mean = s_ref[...] * inv_n
        var = jnp.maximum(sq_ref[...] * inv_n - mean * mean, 0.0)  # biased batch var
        scale = gamma_ref[...] * lax.rsqrt(var + BN_EPS)
        scale_ref[...] = scale
        shift_ref[...] = beta_ref[...] - mean * scale


# ---------------------------------------------------------------------------
# Kernel 2: tiled (BN-apply + matmul + bias + residual + ReLU).
# grid = (Np // tn, Dp // td, Dp // td); K axis last ("arbitrary").
# W is (K, N) layout (pre-transposed once in the wrapper); when `w_resident`
# it is the whole (Dp, Dp) array held in VMEM and sliced in-kernel.
# scale/shift/bias are whole-array VMEM-resident and sliced in-kernel.
# ---------------------------------------------------------------------------
def _residual_block_kernel(x_ref, w_ref, scale_ref, shift_ref, bias_ref,
                           o_ref, acc_ref, *, td, w_resident):
    j = pl.program_id(1)
    k = pl.program_id(2)

    @pl.when(k == 0)
    def _init():
        acc_ref[...] = jnp.zeros_like(acc_ref)

    koff = pl.multiple_of(k * td, td)   # K offset into resident scale/shift (and W rows)
    joff = pl.multiple_of(j * td, td)   # N offset into resident bias (and W cols)

    x = x_ref[...]                      # (tn, td) bf16, raw x tile
    xf = x.astype(jnp.float32)
    # BN as a single fused multiply-add in f32, then bf16 for the MXU operand.
    bn = (xf * scale_ref[:, pl.ds(koff, td)]
          + shift_ref[:, pl.ds(koff, td)]).astype(jnp.bfloat16)

    w = w_ref[pl.ds(koff, td), pl.ds(joff, td)] if w_resident else w_ref[...]
    acc_ref[...] += jnp.dot(bn, w, preferred_element_type=jnp.float32)

    # Residual: D_in == D_out and tk == td, so the k == j LHS tile is exactly
    # x[i-block, j-block].  Fold it into the accumulator -> x is read from HBM
    # only once per j.
    @pl.when(k == j)
    def _residual():
        acc_ref[...] += xf

    @pl.when(k == pl.num_programs(2) - 1)
    def _finalize():
        o_ref[...] = jnp.maximum(
            acc_ref[...] + bias_ref[:, pl.ds(joff, td)], 0.0).astype(o_ref.dtype)


# ---------------------------------------------------------------------------
# Wrapper
# ---------------------------------------------------------------------------
def residual_block_add(x, weight, bias, gamma, beta):
    """x: (N, D) f32.  weight: (D, D) PyTorch (out, in) layout.  bias/gamma/beta: (D,)."""
    n, d = x.shape
    out_dtype = x.dtype

    # Feature padding: lane-dense (multiple of 128); for D > 256 pad to a 512 multiple
    # so td stays at 512/1024 instead of falling back to 128/256.
    dp = _round_up(d, 128) if d <= 256 else _round_up(d, 512)
    td = _pick_d_tile(dp)

    # Batch tile: 512 (near the HBM stream roofline), rounded to 16 (bf16 sublane packing).
    tn = 512 if n >= 512 else _round_up(n, 16)
    np_ = _round_up(n, tn)
    pad_n, pad_d = np_ - n, dp - d

    x_p = jnp.pad(x, ((0, pad_n), (0, pad_d))) if (pad_n or pad_d) else x
    # bf16 x stream: halves the dominant HBM stream; all in-kernel math stays f32.
    x_p = x_p.astype(jnp.bfloat16)

    # One-time (param-init-style) weight transforms: transpose to (in, out) = (K, N)
    # layout so the kernel issues a plain jnp.dot, and cast to bf16 for the MXU.
    w_t = weight.T
    if pad_d:
        w_t = jnp.pad(w_t, ((0, pad_d), (0, pad_d)))
        bias_p = jnp.pad(bias, (0, pad_d))
        gamma_p = jnp.pad(gamma, (0, pad_d))
        beta_p = jnp.pad(beta, (0, pad_d))
    else:
        bias_p, gamma_p, beta_p = bias, gamma, beta
    w_p = w_t.astype(jnp.bfloat16)
    bias_p = bias_p.reshape(1, dp).astype(jnp.float32)
    gamma_p = gamma_p.reshape(1, dp).astype(jnp.float32)
    beta_p = beta_p.reshape(1, dp).astype(jnp.float32)

    # ---- pass 1: BN scale/shift over the full batch (padded rows are zeros; divide by
    #      the real N).  Pure HBM stream -> big tiles (full feature row when it fits).
    td1 = dp if dp <= 4096 else td
    tn1 = tn
    est1 = 2 * (tn1 * td1 * 2) + 8 * (td1 * 4) + 2 * (td1 * 4)
    scale, shift = pl.pallas_call(
        partial(_bn_stats_kernel, inv_n=1.0 / n),
        out_shape=(jax.ShapeDtypeStruct((1, dp), jnp.float32),
                   jax.ShapeDtypeStruct((1, dp), jnp.float32)),
        grid_spec=pltpu.PrefetchScalarGridSpec(
            num_scalar_prefetch=0,
            grid=(dp // td1, np_ // tn1),
            in_specs=[pl.BlockSpec((tn1, td1), lambda j, b: (b, j)),
                      pl.BlockSpec((1, td1), lambda j, b: (0, j)),
                      pl.BlockSpec((1, td1), lambda j, b: (0, j))],
            out_specs=[pl.BlockSpec((1, td1), lambda j, b: (0, j)),
                       pl.BlockSpec((1, td1), lambda j, b: (0, j))],
            scratch_shapes=[pltpu.VMEM((1, td1), jnp.float32),
                            pltpu.VMEM((1, td1), jnp.float32)]),
        compiler_params=pltpu.CompilerParams(
            dimension_semantics=("parallel", "arbitrary"),
            vmem_limit_bytes=_vmem_limit(est1)),
    )(x_p, gamma_p, beta_p)

    # ---- pass 2: tiled matmul + bias + residual + ReLU
    # bf16 W fully VMEM-resident when Dp <= 2048 (<= 8 MiB; fits v7x's 64 MiB/TC budget
    # even double-buffered); otherwise stream (td, td) tiles.
    # TODO(synk): pipeline_mode=pl.Buffered(3) on the streamed W spec is the next knob if
    # profiling shows exposed DMA at j-tile boundaries.
    w_resident = dp <= 2048
    if w_resident:
        w_spec = pl.BlockSpec((dp, dp), lambda i, j, k: (0, 0))
    else:
        w_spec = pl.BlockSpec((td, td), lambda i, j, k: (k, j))

    w_vmem = (dp * dp) if w_resident else (td * td)
    est2 = (2 * tn * td * 2        # x bf16, double-buffered
            + 2 * w_vmem * 2       # W bf16
            + 2 * 3 * dp * 4       # resident scale/shift/bias
            + 2 * tn * td * 4      # output tile, double-buffered
            + tn * td * 4)         # f32 accumulator scratch

    flops = 2 * np_ * dp * dp + 6 * np_ * dp
    bytes_accessed = (np_ * dp * 2 * (dp // td)                       # x, re-read per j
                      + dp * dp * 2 * (1 if w_resident else np_ // tn)
                      + np_ * dp * 4 + 3 * dp * 4)

    out_p = pl.pallas_call(
        partial(_residual_block_kernel, td=td, w_resident=w_resident),
        out_shape=jax.ShapeDtypeStruct((np_, dp), out_dtype),
        grid_spec=pltpu.PrefetchScalarGridSpec(
            num_scalar_prefetch=0,
            grid=(np_ // tn, dp // td, dp // td),
            in_specs=[pl.BlockSpec((tn, td), lambda i, j, k: (i, k)),   # x (LHS; residual at k==j)
                      w_spec,                                           # W, (K, N) layout
                      pl.BlockSpec((1, dp), lambda i, j, k: (0, 0)),    # scale (VMEM-resident)
                      pl.BlockSpec((1, dp), lambda i, j, k: (0, 0)),    # shift (VMEM-resident)
                      pl.BlockSpec((1, dp), lambda i, j, k: (0, 0))],   # bias  (VMEM-resident)
            out_specs=pl.BlockSpec((tn, td), lambda i, j, k: (i, j)),
            scratch_shapes=[pltpu.VMEM((tn, td), jnp.float32)]),
        compiler_params=pltpu.CompilerParams(
            dimension_semantics=("parallel", "parallel", "arbitrary"),
            vmem_limit_bytes=_vmem_limit(est2)),
        cost_estimate=pl.CostEstimate(flops=flops, transcendentals=0,
                                      bytes_accessed=bytes_accessed),
    )(x_p, w_p, scale, shift, bias_p)

    if pad_n or pad_d:
        out_p = out_p[:n, :d]
    return out_p


# ---------------------------------------------------------------------------
# Reference + test
# ---------------------------------------------------------------------------
def _reference(x, weight, bias, gamma, beta):
    mean = jnp.mean(x, axis=0, keepdims=True)
    var = jnp.mean((x - mean) ** 2, axis=0, keepdims=True)
    bn = (x - mean) / jnp.sqrt(var + BN_EPS) * gamma + beta
    y = bn @ weight.T + bias
    return jnp.maximum(y + x, 0.0)


if __name__ == "__main__":
    key = jax.random.PRNGKey(0)

    def _run_case(n, d, case_key):
        k_x, k_w, k_b = jax.random.split(case_key, 3)
        x = jax.random.normal(k_x, (n, d), dtype=jnp.float32)
        # Deterministic synthetic parameters (nn.Linear-style uniform init scale).
        bound = 1.0 / jnp.sqrt(jnp.float32(d))
        weight = jax.random.uniform(k_w, (d, d), jnp.float32, -bound, bound)
        bias = jax.random.uniform(k_b, (d,), jnp.float32, -bound, bound)
        gamma = jnp.ones((d,), jnp.float32)   # BatchNorm1d default affine init
        beta = jnp.zeros((d,), jnp.float32)

        out = jax.block_until_ready(residual_block_add(x, weight, bias, gamma, beta))
        ref = _reference(x, weight, bias, gamma, beta)
        assert out.shape == (n, d)
        # bf16 x / W / activation streams (f32 accumulation) -> bf16-level tolerance
        # vs the pure-f32 reference.
        assert jnp.allclose(out, ref, atol=5e-2, rtol=2e-2), (
            (n, d, float(jnp.max(jnp.abs(out - ref)))))

    k1, k2 = jax.random.split(key)
    _run_case(8, 32, k1)      # module-spec-sized case (hidden=32)
    _run_case(48, 1200, k2)   # exercises padding, multi-(j,k) tiling, resident-W slicing
    print("KERNEL_OK")
</pallas_src>

<mosaic_0001>
module attributes {stable_mosaic.version = 11 : i64} {
  func.func @_bn_stats_kernel(%arg0: i32, %arg1: i32, %arg2: memref<16x128xbf16, #tpu.memory_space<vmem>>, %arg3: memref<1x128xf32, #tpu.memory_space<vmem>>, %arg4: memref<1x128xf32, #tpu.memory_space<vmem>>, %arg5: memref<1x128xf32, #tpu.memory_space<vmem>>, %arg6: memref<1x128xf32, #tpu.memory_space<vmem>>, %arg7: memref<1x128xf32, #tpu.memory_space<vmem>>, %arg8: memref<1x128xf32, #tpu.memory_space<vmem>>) attributes {dimension_semantics = [#tpu.dimension_semantics<parallel>, #tpu.dimension_semantics<arbitrary>], iteration_bounds = array<i64: 1, 1>, scalar_prefetch = 0 : i64, scratch_operands = 2 : i64, tpu.core_type = #tpu.core_type<tc>, window_params = [{transform_indices = @transform_0, window_bounds = array<i64: 16, 128>}, {transform_indices = @transform_1, window_bounds = array<i64: 1, 128>}, {transform_indices = @transform_2, window_bounds = array<i64: 1, 128>}, {transform_indices = @transform_3, window_bounds = array<i64: 1, 128>}, {transform_indices = @transform_4, window_bounds = array<i64: 1, 128>}]} {
    %c0_i32 = arith.constant 0 : i32
    %0 = arith.cmpi eq, %arg1, %c0_i32 : i32
    %1 = arith.extui %0 : i1 to i32
    %c0_i32_0 = arith.constant 0 : i32
    %2 = arith.cmpi ne, %1, %c0_i32_0 : i32
    scf.if %2 {
      %cst_13 = arith.constant 0.000000e+00 : f32
      %19 = vector.broadcast %cst_13 : f32 to vector<1x128xf32>
      %c0_14 = arith.constant 0 : index
      %c0_15 = arith.constant 0 : index
      %20 = vector.load %arg7[%c0_14, %c0_15] : memref<1x128xf32, #tpu.memory_space<vmem>>, vector<1x128xf32>
      tpu.vector_store %arg7[%c0_14, %c0_15], %19 {strides = array<i32>} : memref<1x128xf32, #tpu.memory_space<vmem>>, vector<1x128xf32>,
      %cst_16 = arith.constant 0.000000e+00 : f32
      %21 = vector.broadcast %cst_16 : f32 to vector<1x128xf32>
      %c0_17 = arith.constant 0 : index
      %c0_18 = arith.constant 0 : index
      %22 = vector.load %arg8[%c0_17, %c0_18] : memref<1x128xf32, #tpu.memory_space<vmem>>, vector<1x128xf32>
      tpu.vector_store %arg8[%c0_17, %c0_18], %21 {strides = array<i32>} : memref<1x128xf32, #tpu.memory_space<vmem>>, vector<1x128xf32>,
    } else {
    }
    %c0 = arith.constant 0 : index
    %c0_1 = arith.constant 0 : index
    %3 = vector.load %arg2[%c0, %c0_1] : memref<16x128xbf16, #tpu.memory_space<vmem>>, vector<16x128xbf16>
    %4 = arith.extf %3 : vector<16x128xbf16> to vector<16x128xf32>
    %c0_2 = arith.constant 0 : index
    %c0_3 = arith.constant 0 : index
    %5 = vector.load %arg7[%c0_2, %c0_3] : memref<1x128xf32, #tpu.memory_space<vmem>>, vector<1x128xf32>
    %cst = arith.constant dense<0.000000e+00> : vector<128xf32>
    %6 = vector.multi_reduction <add>, %4, %cst [0] : vector<16x128xf32> to vector<128xf32>
    %7 = vector.shape_cast %6 : vector<128xf32> to vector<1x128xf32>
    %8 = arith.addf %5, %7 : vector<1x128xf32>
    %c0_4 = arith.constant 0 : index
    %c0_5 = arith.constant 0 : index
    %9 = vector.load %arg7[%c0_4, %c0_5] : memref<1x128xf32, #tpu.memory_space<vmem>>, vector<1x128xf32>
    tpu.vector_store %arg7[%c0_4, %c0_5], %8 {strides = array<i32>} : memref<1x128xf32, #tpu.memory_space<vmem>>, vector<1x128xf32>,
    %c0_6 = arith.constant 0 : index
    %c0_7 = arith.constant 0 : index
    %10 = vector.load %arg8[%c0_6, %c0_7] : memref<1x128xf32, #tpu.memory_space<vmem>>, vector<1x128xf32>
    %11 = arith.mulf %4, %4 : vector<16x128xf32>
    %cst_8 = arith.constant dense<0.000000e+00> : vector<128xf32>
    %12 = vector.multi_reduction <add>, %11, %cst_8 [0] : vector<16x128xf32> to vector<128xf32>
    %13 = vector.shape_cast %12 : vector<128xf32> to vector<1x128xf32>
    %14 = arith.addf %10, %13 : vector<1x128xf32>
    %c0_9 = arith.constant 0 : index
    %c0_10 = arith.constant 0 : index
    %15 = vector.load %arg8[%c0_9, %c0_10] : memref<1x128xf32, #tpu.memory_space<vmem>>, vector<1x128xf32>
    tpu.vector_store %arg8[%c0_9, %c0_10], %14 {strides = array<i32>} : memref<1x128xf32, #tpu.memory_space<vmem>>, vector<1x128xf32>,
    %c0_i32_11 = arith.constant 0 : i32
    %16 = arith.cmpi eq, %arg1, %c0_i32_11 : i32
    %17 = arith.extui %16 : i1 to i32
    %c0_i32_12 = arith.constant 0 : i32
    %18 = arith.cmpi ne, %17, %c0_i32_12 : i32
    scf.if %18 {
      %c0_13 = arith.constant 0 : index
      %c0_14 = arith.constant 0 : index
      %19 = vector.load %arg7[%c0_13, %c0_14] : memref<1x128xf32, #tpu.memory_space<vmem>>, vector<1x128xf32>
      %cst_15 = arith.constant 1.250000e-01 : f32
      %20 = vector.broadcast %cst_15 : f32 to vector<1x128xf32>
      %21 = arith.mulf %19, %20 : vector<1x128xf32>
      %c0_16 = arith.constant 0 : index
      %c0_17 = arith.constant 0 : index
      %22 = vector.load %arg8[%c0_16, %c0_17] : memref<1x128xf32, #tpu.memory_space<vmem>>, vector<1x128xf32>
      %cst_18 = arith.constant 1.250000e-01 : f32
      %23 = vector.broadcast %cst_18 : f32 to vector<1x128xf32>
      %24 = arith.mulf %22, %23 : vector<1x128xf32>
      %25 = arith.mulf %21, %21 : vector<1x128xf32>
      %26 = arith.subf %24, %25 : vector<1x128xf32>
      %cst_19 = arith.constant 0.000000e+00 : f32
      %27 = vector.broadcast %cst_19 : f32 to vector<1x128xf32>
      %28 = arith.maximumf %26, %27 : vector<1x128xf32>
      %c0_20 = arith.constant 0 : index
      %c0_21 = arith.constant 0 : index
      %29 = vector.load %arg3[%c0_20, %c0_21] : memref<1x128xf32, #tpu.memory_space<vmem>>, vector<1x128xf32>
      %cst_22 = arith.constant 9.99999974E-6 : f32
      %30 = vector.broadcast %cst_22 : f32 to vector<1x128xf32>
      %31 = arith.addf %28, %30 : vector<1x128xf32>
      %32 = math.rsqrt %31 : vector<1x128xf32>
      %33 = arith.mulf %29, %32 : vector<1x128xf32>
      %c0_23 = arith.constant 0 : index
      %c0_24 = arith.constant 0 : index
      %34 = vector.load %arg5[%c0_23, %c0_24] : memref<1x128xf32, #tpu.memory_space<vmem>>, vector<1x128xf32>
      tpu.vector_store %arg5[%c0_23, %c0_24], %33 {strides = array<i32>} : memref<1x128xf32, #tpu.memory_space<vmem>>, vector<1x128xf32>,
      %c0_25 = arith.constant 0 : index
      %c0_26 = arith.constant 0 : index
      %35 = vector.load %arg4[%c0_25, %c0_26] : memref<1x128xf32, #tpu.memory_space<vmem>>, vector<1x128xf32>
      %36 = arith.mulf %21, %33 : vector<1x128xf32>
      %37 = arith.subf %35, %36 : vector<1x128xf32>
      %c0_27 = arith.constant 0 : index
      %c0_28 = arith.constant 0 : index
      %38 = vector.load %arg6[%c0_27, %c0_28] : memref<1x128xf32, #tpu.memory_space<vmem>>, vector<1x128xf32>
      tpu.vector_store %arg6[%c0_27, %c0_28], %37 {strides = array<i32>} : memref<1x128xf32, #tpu.memory_space<vmem>>, vector<1x128xf32>,
    } else {
    }
    return
  }
  func.func @transform_0(%arg0: i32, %arg1: i32) -> (i32, i32) {
    %c0_i32 = arith.constant 0 : i32
    return %arg1, %arg0 : i32, i32
  }
  func.func @transform_1(%arg0: i32, %arg1: i32) -> (i32, i32) {
    %c0_i32 = arith.constant 0 : i32
    %c0_i32_0 = arith.constant 0 : i32
    return %c0_i32, %arg0 : i32, i32
  }
  func.func @transform_2(%arg0: i32, %arg1: i32) -> (i32, i32) {
    %c0_i32 = arith.constant 0 : i32
    %c0_i32_0 = arith.constant 0 : i32
    return %c0_i32, %arg0 : i32, i32
  }
  func.func @transform_3(%arg0: i32, %arg1: i32) -> (i32, i32) {
    %c0_i32 = arith.constant 0 : i32
    %c0_i32_0 = arith.constant 0 : i32
    return %c0_i32, %arg0 : i32, i32
  }
  func.func @transform_4(%arg0: i32, %arg1: i32) -> (i32, i32) {
    %c0_i32 = arith.constant 0 : i32
    %c0_i32_0 = arith.constant 0 : i32
    return %c0_i32, %arg0 : i32, i32
  }
}

</mosaic_0001>

<llo_original>
// kernel: tpu_custom_call.1
$region0: #{tpu_custom_call.1}
  #allocation0 [shape = 'u32[]', space=smem, size = 0x4, offset = 0x4, fixed_abs, tag = 'smem constant byte address 0x4 - core index']
  #allocation1 [shape = 'u32[72,128]{1,0:T(1,128)}', space=vmem, size = 0x9000, scoped, tag = 'internal scratch']
  #allocation2 [shape = 'f32[1,128]{1,0:T(1,128)}', space=vmem, size = 0x200, scoped, tag = 'scratch operand']
  #allocation3 [shape = 'f32[1,128]{1,0:T(1,128)}', space=vmem, size = 0x200, scoped, tag = 'scratch operand']
  %s0 = inlined_call_operand.hbm [shape: bf16[16,128], index: 0, kind: input, shape index: {}]
  %s1 = inlined_call_operand.hbm [shape: f32[1,128], index: 1, kind: input, shape index: {}]
  %s2 = inlined_call_operand.vmem [shape: f32[1,128], index: 2, kind: input, shape index: {}]
  %s3 = inlined_call_operand.hbm [shape: f32[1,128], index: 3, kind: output, shape index: {0}]
  %s4 = inlined_call_operand.hbm [shape: f32[1,128], index: 4, kind: output, shape index: {1}]
  %5 = xla_tuple %s3, %s4
  %s6 = sld [smem:[#allocation0]]
  $region46: #{tpu_custom_call.1} parent=0
    _
  %s8 = ssub.s32 1, %s6
  %s9 = scalar_select 0, %s8, %s6
  $region1: #{tpu_custom_call.1} parent=0
    #allocation4 [shape = 'u8[4096]{0}', space=vmem, size = 0x1000, scoped, tag = 'input window, operand 0, single buffered']
    #allocation5 [shape = 's32[1]{0}', space=sflag, size = 0x4, scoped, tag = 'scoped memory for tpu_custom_call.1']
    #allocation6 [shape = 's32[1]{0}', space=sflag, size = 0x4, scoped, tag = 'scoped memory for tpu_custom_call.1']
    #allocation7 [shape = 'u8[512]{0}', space=vmem, size = 0x400, scoped, tag = 'input window, operand 1, single buffered']
    #allocation8 [shape = 's32[1]{0}', space=sflag, size = 0x4, scoped, tag = 'scoped memory for tpu_custom_call.1']
    #allocation9 [shape = 'u8[512]{0}', space=vmem, size = 0x400, scoped, tag = 'output window, operand 0, single buffered']
    #allocation10 [shape = 'u8[512]{0}', space=vmem, size = 0x400, scoped, tag = 'output window, operand 1, single buffered']
    #allocation11 [shape = 's32[1]{0}', space=sflag, size = 0x4, scoped, tag = 'scoped memory for tpu_custom_call.1']
    %10 = vsyncpa [#allocation5], 0
    %11 = vsyncpa [#allocation8], 0
    %12 = vsyncpa [#allocation6], 0
    %13 = vsyncpa [#allocation11], 0
    // Predicated region
    $region2: #{tpu_custom_call.1} parent=1 // pred_check
      _
    $region3: #{tpu_custom_call.1} parent=1 // pred_check_branch
      %15 = sbr.rel (0) target = $region5
    $region4: #{tpu_custom_call.1} parent=1 // pred_region
      %17 = vsyncadd [#allocation5], 0
      %s18 = sshll.u32 %s0, 4
      %s19 = int_to_ptr.hbm [resolvable:$true] %s18
      %s20 = sshll.u32 [#allocation4], 4
      %s21 = int_to_ptr.vmem [resolvable:$true] %s20
      %26 = dma.hbm_to_vmem [thread:$0]  %s19, 128, %s21, [#allocation5], 64, 64, 4
    $region5: #{tpu_custom_call.1} parent=1 // pred_fallthru
      _
    // Predicated region
    $region6: #{tpu_custom_call.1} parent=1 // pred_check
      _
    $region7: #{tpu_custom_call.1} parent=1 // pred_check_branch
      %28 = sbr.rel (0) target = $region9
    $region8: #{tpu_custom_call.1} parent=1 // pred_region
      %30 = vsyncadd [#allocation8], 0
      %s32 = sshll.u32 %s1, 4
      %s33 = int_to_ptr.hbm [resolvable:$true] %s32
      %s34 = sshll.u32 [#allocation7], 4
      %s35 = int_to_ptr.vmem [resolvable:$true] %s34
      %37 = dma.hbm_to_vmem [thread:$0]  %s33, 16, %s35, [#allocation8]
    $region9: #{tpu_custom_call.1} parent=1 // pred_fallthru
      _
    // Predicated region
    $region10: #{tpu_custom_call.1} parent=1 // pred_check
      _
    $region11: #{tpu_custom_call.1} parent=1 // pred_check_branch
      %39 = sbr.rel (0) target = $region13
    $region12: #{tpu_custom_call.1} parent=1 // pred_region
      _
    $region13: #{tpu_custom_call.1} parent=1 // pred_fallthru
      _
    // Predicated region
    $region14: #{tpu_custom_call.1} parent=1 // pred_check
      _
    $region15: #{tpu_custom_call.1} parent=1 // pred_check_branch
      %41 = sbr.rel (0) target = $region17
    $region16: #{tpu_custom_call.1} parent=1 // pred_region
      %43 = dma.done [#allocation5], 128
    $region17: #{tpu_custom_call.1} parent=1 // pred_fallthru
      _
    // Predicated region
    $region18: #{tpu_custom_call.1} parent=1 // pred_check
      _
    $region19: #{tpu_custom_call.1} parent=1 // pred_check_branch
      %45 = sbr.rel (0) target = $region21
    $region20: #{tpu_custom_call.1} parent=1 // pred_region
      %47 = dma.done [#allocation8], 16
    $region21: #{tpu_custom_call.1} parent=1 // pred_fallthru
      _
    %p48 = scmp.eq.s32.totalorder 0, 0
    // Predicated region
    $region22: #{tpu_custom_call.1} parent=1 // pred_check
      %p49 = pneg %p48
    $region23: #{tpu_custom_call.1} parent=1 // pred_check_branch
      %51 = sbr.rel (%p49) target = $region25
    $region24: #{tpu_custom_call.1} parent=1 // pred_region
      %52 = vst [vmem:[#allocation2] sm:$0x1] 0.0
      %53 = vst [vmem:[#allocation3] sm:$0x1] 0.0
    $region25: #{tpu_custom_call.1} parent=1 // pred_fallthru
      _
    %v54 = vld [vmem:[#allocation4] sm:$0xf]
    %v55 = vld [vmem:[#allocation4 + $0x4] sm:$0xf]
    %v56 = vunpack.c.l.bf16 %v54
    %v57 = vunpack.c.l.bf16 %v55
    %v58 = vld [vmem:[#allocation2] sm:$0x1]
    %v59 = vadd.f32 %v56, %v57
    %v60 = vrot.slane %v59, 4
    %v61 = vadd.f32 %v59, %v60
    %v62 = vrot.slane %v61, 2
    %v63 = vadd.f32 %v61, %v62
    %v64 = vrot.slane %v63, 1
    %v65 = vadd.f32 %v63, %v64
    %v66 = vadd.f32 %v58, %v65
    %67 = vst [vmem:[#allocation2] sm:$0x1] %v66
    %v68 = vld [vmem:[#allocation3] sm:$0x1]
    %v69 = vmul.f32 %v56, %v56
    %v70 = vmul.f32 %v57, %v57
    %v71 = vadd.f32 %v69, %v70
    %v72 = vrot.slane %v71, 4
    %v73 = vadd.f32 %v71, %v72
    %v74 = vrot.slane %v73, 2
    %v75 = vadd.f32 %v73, %v74
    %v76 = vrot.slane %v75, 1
    %v77 = vadd.f32 %v75, %v76
    %v78 = vadd.f32 %v68, %v77
    %79 = vst [vmem:[#allocation3] sm:$0x1] %v78
    // Predicated region
    $region26: #{tpu_custom_call.1} parent=1 // pred_check
      %p80 = pneg %p48
    $region27: #{tpu_custom_call.1} parent=1 // pred_check_branch
      %82 = sbr.rel (%p80) target = $region29
    $region28: #{tpu_custom_call.1} parent=1 // pred_region
      %v83 = vld [vmem:[#allocation2] sm:$0x1]
      %v84 = vmul.f32 %v83, 0.125
      %v85 = vld [vmem:[#allocation3] sm:$0x1]
      %v86 = vmul.f32 %v85, 0.125
      %v87 = vmul.f32 %v84, %v84
      %v88 = vsub.f32 %v86, %v87
      %v89 = vmax.f32 %v88, 0.0
      %v90 = vld [vmem:[#allocation7] sm:$0x1]
      %v91 = vadd.f32 %v89, 1e-05
      %v92 = vrsqrt.pop %v91
      %v93 = vmul.f32 %v92, %v91
      %v94 = vmul.f32 %v93, %v92
      %v95 = vmul.f32 0.5, %v94
      %v96 = vsub.f32 1.5, %v95
      %v97 = vmul.f32 %v92, %v96
      %vm98 = vweird.f32 %v91
      %vm99 = vweird.f32 %v92
      %vm100 = vmor %vm98, %vm99
      %v101 = vsel %vm100, %v92, %v97
      %v102 = vmul.f32 %v90, %v101
      %103 = vst [vmem:[#allocation9] sm:$0x1] %v102
      %v104 = vld [vmem:[%s2] sm:$0x1]
      %v105 = vmul.f32 %v84, %v102
      %v106 = vsub.f32 %v104, %v105
      %107 = vst [vmem:[#allocation10] sm:$0x1] %v106
    $region29: #{tpu_custom_call.1} parent=1 // pred_fallthru
      _
    // Predicated region
    $region30: #{tpu_custom_call.1} parent=1 // pred_check
      _
    $region31: #{tpu_custom_call.1} parent=1 // pred_check_branch
      %109 = sbr.rel (0) target = $region33
    $region32: #{tpu_custom_call.1} parent=1 // pred_region
      %111 = vsyncadd [#allocation6], 0
      %s113 = sshll.u32 [#allocation9], 4
      %s114 = int_to_ptr.vmem [resolvable:$true] %s113
      %s115 = sshll.u32 %s3, 4
      %s116 = int_to_ptr.hbm [resolvable:$true] %s115
      %118 = dma.vmem_to_hbm [thread:$0]  %s114, 16, %s116, [#allocation6]
    $region33: #{tpu_custom_call.1} parent=1 // pred_fallthru
      _
    // Predicated region
    $region34: #{tpu_custom_call.1} parent=1 // pred_check
      _
    $region35: #{tpu_custom_call.1} parent=1 // pred_check_branch
      %120 = sbr.rel (0) target = $region37
    $region36: #{tpu_custom_call.1} parent=1 // pred_region
      %122 = vsyncadd [#allocation11], 0
      %s124 = sshll.u32 [#allocation10], 4
      %s125 = int_to_ptr.vmem [resolvable:$true] %s124
      %s126 = sshll.u32 %s4, 4
      %s127 = int_to_ptr.hbm [resolvable:$true] %s126
      %129 = dma.vmem_to_hbm [thread:$0]  %s125, 16, %s127, [#allocation11]
    $region37: #{tpu_custom_call.1} parent=1 // pred_fallthru
      _
    // Predicated region
    $region38: #{tpu_custom_call.1} parent=1 // pred_check
      _
    $region39: #{tpu_custom_call.1} parent=1 // pred_check_branch
      %131 = sbr.rel (0) target = $region41
    $region40: #{tpu_custom_call.1} parent=1 // pred_region
      %133 = dma.done [#allocation6], 16
    $region41: #{tpu_custom_call.1} parent=1 // pred_fallthru
      _
    // Predicated region
    $region42: #{tpu_custom_call.1} parent=1 // pred_check
      _
    $region43: #{tpu_custom_call.1} parent=1 // pred_check_branch
      %135 = sbr.rel (0) target = $region45
    $region44: #{tpu_custom_call.1} parent=1 // pred_region
      %137 = dma.done [#allocation11], 16
    $region45: #{tpu_custom_call.1} parent=1 // pred_fallthru
      _
    %138 = vsyncpa [#allocation5], 1
    %139 = vsyncpa [#allocation8], 1
    %140 = vsyncpa [#allocation6], 1
    %141 = vsyncpa [#allocation11], 1

</llo_original>
